<compile_context>
chip_gen: v6e
topology: v6e:2x2x1
jax: 0.10.0
libtpu: 0.0.40
codegen_flags: <defaults>
</compile_context>

<pallas_src>
import functools

import jax
import jax.numpy as jnp
from jax import lax
from jax.experimental import pallas as pl
from jax.experimental.pallas import tpu as pltpu

FP_LENGTH = 128
HIDDEN = 128


def mlp_kernel(x_ref, w1_ref, b1_ref, w2_ref, b2_ref, w3_ref, b3_ref, o_ref):
    # Cast the f32 x tile to bf16 on the VPU (hidden under the input DMA).
    x = x_ref[...].astype(jnp.bfloat16)
    # layer1 + ReLU: bf16 MXU matmul, f32 accumulation / VPU epilogue.
    h1 = jnp.dot(x, w1_ref[...], preferred_element_type=jnp.float32)
    h1 = jnp.maximum(h1 + b1_ref[...], 0.0)
    # layer2 + ReLU
    h2 = jnp.dot(h1.astype(jnp.bfloat16), w2_ref[...],
                 preferred_element_type=jnp.float32)
    h2 = jnp.maximum(h2 + b2_ref[...], 0.0)
    # dropout(p=0.1): identity in eval mode.
    # TODO(synk): training-mode dropout would use pltpu.prng_seed + prng_random_bits.
    # layer3, lane-dense: (8,128) @ (bt,128)^T -> (8, bt); row 0 is the result.
    out8 = lax.dot_general(w3_ref[...], h2.astype(jnp.bfloat16),
                           dimension_numbers=(((1,), (1,)), ((), ())),
                           preferred_element_type=jnp.float32)
    o_ref[...] = (out8[0:1, :] + b3_ref[...]).astype(o_ref.dtype)


def _round_up(n, m):
    return ((n + m - 1) // m) * m


def _choose_tile(B, b_tile):
    """Batch tile: multiple of 128 (lane-dense output alignment + bf16 sublane
    packing); >= 2 grid steps for non-tiny batches so v7x megacore gets work."""
    b_tile = max(128, _round_up(b_tile, 128))
    n = pl.cdiv(B, b_tile)
    if B >= 2 * 128 and n < 2:
        n = 2
    return max(128, _round_up(pl.cdiv(B, n), 128))


@functools.partial(jax.jit, static_argnames=("b_tile",))
def classification_network_forward(x, prepared, *, b_tile=4096):
    """x: [B, 128] float32.  prepared: output of prepare_params().
    Returns [B, 1] float32 (eval-mode forward)."""
    w1_b, b1, w2_b, b2, w3_b, b3 = prepared
    B = x.shape[0]

    bt = _choose_tile(B, b_tile)
    if B < bt:  # only tiny batches (< one tile) are padded; big batches stream ragged
        x = jnp.pad(x, ((0, bt - B), (0, 0)))
    num_tiles = pl.cdiv(x.shape[0], bt)
    Bp = num_tiles * bt

    flops = 2 * Bp * (FP_LENGTH * HIDDEN + HIDDEN * HIDDEN + HIDDEN)
    bytes_accessed = (x.size * 4
                      + (w1_b.size + w2_b.size + w3_b.size) * 2
                      + (b1.size + b2.size + b3.size) * 4
                      + Bp * 4)

    resident = lambda s: pl.BlockSpec(s, lambda i: (0, 0))  # VMEM-resident weights

    out = pl.pallas_call(
        mlp_kernel,
        out_shape=jax.ShapeDtypeStruct((1, Bp), jnp.float32),
        grid=(num_tiles,),
        in_specs=[
            pl.BlockSpec((bt, FP_LENGTH), lambda i: (i, 0)),   # streamed f32 x tiles
            resident(w1_b.shape), resident(b1.shape),
            resident(w2_b.shape), resident(b2.shape),
            resident(w3_b.shape), resident(b3.shape),
        ],
        out_specs=pl.BlockSpec((1, bt), lambda i: (0, i)),      # lane-dense row
        compiler_params=pltpu.CompilerParams(
            dimension_semantics=("parallel",)),
        cost_estimate=pl.CostEstimate(
            flops=flops, transcendentals=0, bytes_accessed=bytes_accessed),
    )(x, w1_b, b1, w2_b, b2, w3_b, b3)

    return out[0, :B].reshape(B, 1)


def init_params(key):
    """fp32 params mimicking nn.Linear defaults (uniform +-1/sqrt(fan_in)).
    Weights stored [in, out]; w3 as [128, 1]."""
    k1, k2, k3, k4, k5, k6 = jax.random.split(key, 6)

    def lin(kw, kb, fan_in, fan_out):
        bound = 1.0 / (fan_in ** 0.5)
        w = jax.random.uniform(kw, (fan_in, fan_out), jnp.float32, -bound, bound)
        b = jax.random.uniform(kb, (fan_out,), jnp.float32, -bound, bound)
        return w, b

    w1, b1 = lin(k1, k2, FP_LENGTH, HIDDEN)
    w2, b2 = lin(k3, k4, HIDDEN, HIDDEN)
    w3, b3 = lin(k5, k6, HIDDEN, 1)
    return (w1, b1, w2, b2, w3, b3)


def prepare_params(params):
    """One-time prep outside the hot path: cast matmul weights to bf16, reshape
    biases to rows, and pack w3 into an 8-row MXU-aligned tile (row 0 used)."""
    w1, b1, w2, b2, w3, b3 = params
    w3_row = w3.reshape(1, HIDDEN).astype(jnp.bfloat16)
    return (w1.astype(jnp.bfloat16), b1.reshape(1, HIDDEN),
            w2.astype(jnp.bfloat16), b2.reshape(1, HIDDEN),
            jnp.tile(w3_row, (8, 1)), b3.reshape(1, 1))


def reference_forward(x, params):
    """Pure-JAX fp32 reference (eval-mode forward of the PyTorch module)."""
    w1, b1, w2, b2, w3, b3 = params
    h = jnp.maximum(x @ w1 + b1, 0.0)
    h = jnp.maximum(h @ w2 + b2, 0.0)
    return h @ w3 + b3


if __name__ == "__main__":
    key = jax.random.PRNGKey(0)
    k_params, k_x = jax.random.split(key)
    params = init_params(k_params)
    prepared = prepare_params(params)

    B = 300  # not a multiple of 128 -> exercises the ragged final block
    x = jax.random.normal(k_x, (B, FP_LENGTH), jnp.float32)
    ref = reference_forward(x, params)

    # Default tile: 2 grid steps (megacore heuristic), ragged second tile.
    out = jax.block_until_ready(classification_network_forward(x, prepared))
    assert out.shape == (B, 1)
    assert jnp.allclose(out, ref, atol=2e-2, rtol=2e-2), (
        float(jnp.max(jnp.abs(out - ref))))

    # Small explicit tile: 3 grid steps, exercises pipelining + ragged edge.
    out2 = jax.block_until_ready(
        classification_network_forward(x, prepared, b_tile=128))
    assert out2.shape == (B, 1)
    assert jnp.allclose(out2, ref, atol=2e-2, rtol=2e-2), (
        float(jnp.max(jnp.abs(out2 - ref))))

    # Tiny batch (< one tile) -> exercises the small-batch padding path.
    xs = x[:20]
    out3 = jax.block_until_ready(classification_network_forward(xs, prepared))
    assert out3.shape == (20, 1)
    assert jnp.allclose(out3, ref[:20], atol=2e-2, rtol=2e-2), (
        float(jnp.max(jnp.abs(out3 - ref[:20]))))

    print("KERNEL_OK")
</pallas_src>

<mosaic_0001>
module attributes {stable_mosaic.version = 11 : i64} {
  func.func @mlp_kernel(%arg0: i32, %arg1: memref<256x128xf32, #tpu.memory_space<vmem>>, %arg2: memref<128x128xbf16, #tpu.memory_space<vmem>>, %arg3: memref<1x128xf32, #tpu.memory_space<vmem>>, %arg4: memref<128x128xbf16, #tpu.memory_space<vmem>>, %arg5: memref<1x128xf32, #tpu.memory_space<vmem>>, %arg6: memref<8x128xbf16, #tpu.memory_space<vmem>>, %arg7: memref<1x1xf32, #tpu.memory_space<vmem>>, %arg8: memref<1x256xf32, #tpu.memory_space<vmem>>) attributes {dimension_semantics = [#tpu.dimension_semantics<parallel>], iteration_bounds = array<i64: 2>, scalar_prefetch = 0 : i64, scratch_operands = 0 : i64, tpu.core_type = #tpu.core_type<tc>, window_params = [{transform_indices = @transform_0, window_bounds = array<i64: 256, 128>}, {pipeline_mode = #tpu.pipeline_mode<synchronous>, transform_indices = @transform_1, window_bounds = array<i64: 128, 128>}, {pipeline_mode = #tpu.pipeline_mode<synchronous>, transform_indices = @transform_2, window_bounds = array<i64: 1, 128>}, {pipeline_mode = #tpu.pipeline_mode<synchronous>, transform_indices = @transform_3, window_bounds = array<i64: 128, 128>}, {pipeline_mode = #tpu.pipeline_mode<synchronous>, transform_indices = @transform_4, window_bounds = array<i64: 1, 128>}, {pipeline_mode = #tpu.pipeline_mode<synchronous>, transform_indices = @transform_5, window_bounds = array<i64: 8, 128>}, {pipeline_mode = #tpu.pipeline_mode<synchronous>, transform_indices = @transform_6, window_bounds = array<i64: 1, 1>}, {transform_indices = @transform_7, window_bounds = array<i64: 1, 256>}]} {
    %c0 = arith.constant 0 : index
    %c0_0 = arith.constant 0 : index
    %0 = vector.load %arg1[%c0, %c0_0] : memref<256x128xf32, #tpu.memory_space<vmem>>, vector<256x128xf32>
    %1 = arith.truncf %0 : vector<256x128xf32> to vector<256x128xbf16>
    %c0_1 = arith.constant 0 : index
    %c0_2 = arith.constant 0 : index
    %2 = vector.load %arg2[%c0_1, %c0_2] : memref<128x128xbf16, #tpu.memory_space<vmem>>, vector<128x128xbf16>
    %cst = arith.constant dense<0.000000e+00> : vector<256x128xf32>
    %3 = tpu.matmul %1, %2, %cst {dimension_numbers = #tpu.dot_dimension_numbers<[1], [0], [0], [1], [0, 0, 1, 1], [], []>} : vector<256x128xbf16>, vector<128x128xbf16>, vector<256x128xf32> -> vector<256x128xf32>
    %c0_3 = arith.constant 0 : index
    %c0_4 = arith.constant 0 : index
    %4 = vector.load %arg3[%c0_3, %c0_4] : memref<1x128xf32, #tpu.memory_space<vmem>>, vector<1x128xf32>
    %5 = vector.broadcast %4 : vector<1x128xf32> to vector<256x128xf32>
    %6 = arith.addf %3, %5 : vector<256x128xf32>
    %cst_5 = arith.constant 0.000000e+00 : f32
    %7 = vector.broadcast %cst_5 : f32 to vector<256x128xf32>
    %8 = arith.maximumf %6, %7 : vector<256x128xf32>
    %9 = arith.truncf %8 : vector<256x128xf32> to vector<256x128xbf16>
    %c0_6 = arith.constant 0 : index
    %c0_7 = arith.constant 0 : index
    %10 = vector.load %arg4[%c0_6, %c0_7] : memref<128x128xbf16, #tpu.memory_space<vmem>>, vector<128x128xbf16>
    %cst_8 = arith.constant dense<0.000000e+00> : vector<256x128xf32>
    %11 = tpu.matmul %9, %10, %cst_8 {dimension_numbers = #tpu.dot_dimension_numbers<[1], [0], [0], [1], [0, 0, 1, 1], [], []>} : vector<256x128xbf16>, vector<128x128xbf16>, vector<256x128xf32> -> vector<256x128xf32>
    %c0_9 = arith.constant 0 : index
    %c0_10 = arith.constant 0 : index
    %12 = vector.load %arg5[%c0_9, %c0_10] : memref<1x128xf32, #tpu.memory_space<vmem>>, vector<1x128xf32>
    %13 = vector.broadcast %12 : vector<1x128xf32> to vector<256x128xf32>
    %14 = arith.addf %11, %13 : vector<256x128xf32>
    %cst_11 = arith.constant 0.000000e+00 : f32
    %15 = vector.broadcast %cst_11 : f32 to vector<256x128xf32>
    %16 = arith.maximumf %14, %15 : vector<256x128xf32>
    %c0_12 = arith.constant 0 : index
    %c0_13 = arith.constant 0 : index
    %17 = vector.load %arg6[%c0_12, %c0_13] : memref<8x128xbf16, #tpu.memory_space<vmem>>, vector<8x128xbf16>
    %18 = arith.truncf %16 : vector<256x128xf32> to vector<256x128xbf16>
    %cst_14 = arith.constant dense<0.000000e+00> : vector<8x256xf32>
    %19 = tpu.matmul %17, %18, %cst_14 {dimension_numbers = #tpu.dot_dimension_numbers<[1], [1], [0], [0], [0, 0, 1, 0], [], []>} : vector<8x128xbf16>, vector<256x128xbf16>, vector<8x256xf32> -> vector<8x256xf32>
    %20 = vector.extract_strided_slice %19 {offsets = [0, 0], sizes = [1, 256], strides = [1, 1]} : vector<8x256xf32> to vector<1x256xf32>
    %c0_15 = arith.constant 0 : index
    %c0_16 = arith.constant 0 : index
    %21 = vector.load %arg7[%c0_15, %c0_16] : memref<1x1xf32, #tpu.memory_space<vmem>>, vector<1x1xf32>
    %22 = vector.broadcast %21 : vector<1x1xf32> to vector<1x256xf32>
    %23 = arith.addf %20, %22 : vector<1x256xf32>
    %c0_17 = arith.constant 0 : index
    %c0_18 = arith.constant 0 : index
    %24 = vector.load %arg8[%c0_17, %c0_18] : memref<1x256xf32, #tpu.memory_space<vmem>>, vector<1x256xf32>
    tpu.vector_store %arg8[%c0_17, %c0_18], %23 {strides = array<i32>} : memref<1x256xf32, #tpu.memory_space<vmem>>, vector<1x256xf32>,
    return
  }
  func.func @transform_0(%arg0: i32) -> (i32, i32) {
    %c0_i32 = arith.constant 0 : i32
    %c0_i32_0 = arith.constant 0 : i32
    return %arg0, %c0_i32 : i32, i32
  }
  func.func @transform_1(%arg0: i32) -> (i32, i32) {
    %c0_i32 = arith.constant 0 : i32
    %c0_i32_0 = arith.constant 0 : i32
    %c0_i32_1 = arith.constant 0 : i32
    return %c0_i32, %c0_i32_0 : i32, i32
  }
  func.func @transform_2(%arg0: i32) -> (i32, i32) {
    %c0_i32 = arith.constant 0 : i32
    %c0_i32_0 = arith.constant 0 : i32
    %c0_i32_1 = arith.constant 0 : i32
    return %c0_i32, %c0_i32_0 : i32, i32
  }
  func.func @transform_3(%arg0: i32) -> (i32, i32) {
    %c0_i32 = arith.constant 0 : i32
    %c0_i32_0 = arith.constant 0 : i32
    %c0_i32_1 = arith.constant 0 : i32
    return %c0_i32, %c0_i32_0 : i32, i32
  }
  func.func @transform_4(%arg0: i32) -> (i32, i32) {
    %c0_i32 = arith.constant 0 : i32
    %c0_i32_0 = arith.constant 0 : i32
    %c0_i32_1 = arith.constant 0 : i32
    return %c0_i32, %c0_i32_0 : i32, i32
  }
  func.func @transform_5(%arg0: i32) -> (i32, i32) {
    %c0_i32 = arith.constant 0 : i32
    %c0_i32_0 = arith.constant 0 : i32
    %c0_i32_1 = arith.constant 0 : i32
    return %c0_i32, %c0_i32_0 : i32, i32
  }
  func.func @transform_6(%arg0: i32) -> (i32, i32) {
    %c0_i32 = arith.constant 0 : i32
    %c0_i32_0 = arith.constant 0 : i32
    %c0_i32_1 = arith.constant 0 : i32
    return %c0_i32, %c0_i32_0 : i32, i32
  }
  func.func @transform_7(%arg0: i32) -> (i32, i32) {
    %c0_i32 = arith.constant 0 : i32
    %c0_i32_0 = arith.constant 0 : i32
    return %c0_i32, %arg0 : i32, i32
  }
}

</mosaic_0001>

<llo_original>
// kernel: classification_network_forward.1
$region0: #{classification_network_forward.1}
  #allocation0 [shape = 'u32[]', space=smem, size = 0x4, offset = 0x4, fixed_abs, tag = 'smem constant byte address 0x4 - core index']
  #allocation1 [shape = 'u32[144,128]{1,0:T(1,128)}', space=vmem, size = 0x12000, scoped, tag = 'internal scratch']
  #allocation2 [shape = 'f32[1,1]{1,0:T(1,128)S(1)}', space=vmem, size = 0x200, scoped, tag = 'scoped memory for classification_network_forward.1']
  %s0 = inlined_call_operand.hbm [shape: f32[300,128], index: 0, kind: input, shape index: {}]
  %s1 = inlined_call_operand.hbm [shape: bf16[128,128], index: 1, kind: input, shape index: {}]
  %s2 = inlined_call_operand.vmem [shape: f32[1,128], index: 2, kind: input, shape index: {}]
  %s3 = inlined_call_operand.hbm [shape: bf16[128,128], index: 3, kind: input, shape index: {}]
  %s4 = inlined_call_operand.vmem [shape: f32[1,128], index: 4, kind: input, shape index: {}]
  %s5 = inlined_call_operand.vmem [shape: bf16[8,128], index: 5, kind: input, shape index: {}]
  %s6 = inlined_call_operand.<no memory space> [shape: f32[1,1], index: 6, kind: input, shape index: {}]
  %s7 = inlined_call_operand.vmem [shape: f32[1,512], index: 7, kind: output, shape index: {}]
  %s8 = sld [smem:[#allocation0]]
  $region73: #{classification_network_forward.1} parent=0
    _
  %s10 = ssub.s32 1, %s8
  %s11 = scalar_select 0, %s10, %s8
  %v12 = vstv %s6
  %13 = vst [vmem:[#allocation2] sm:$0x1] %v12
  $region1: #{classification_network_forward.1} parent=0
    #allocation3 [shape = 'u8[262144]{0}', space=vmem, size = 0x40000, scoped, tag = 'input window, operand 0']
    #allocation4 [shape = 's32[2]{0}', space=sflag, size = 0x8, scoped, tag = 'scoped memory for classification_network_forward.1']
    #allocation5 [shape = 'u8[32768]{0}', space=vmem, size = 0x8000, scoped, tag = 'input window, operand 1, single buffered']
    #allocation6 [shape = 's32[1]{0}', space=sflag, size = 0x4, scoped, tag = 'scoped memory for classification_network_forward.1']
    #allocation7 [shape = 'u8[32768]{0}', space=vmem, size = 0x8000, scoped, tag = 'input window, operand 3, single buffered']
    %14 = vsyncpa [#allocation4], 0
    %s15 = scalar_lea.sflag [#allocation4], 1
    %16 = vsyncpa %s15, 0
    %17 = vsyncpa [#allocation6], 0
    loop: start=0, step=1, limit=4
    $region2: #{classification_network_forward.1} parent=1 // loop_pre_header
      _
    $region3: #{classification_network_forward.1} parent=1 // loop_header
      %s19 = sphi 0, %s23
      %p20 = scmp.ge.s32.totalorder %s19, 4
      %s29 = sphi 0, %s31
      %s32 = sphi 0, %s29
      %s33 = sphi 0, %s32
      %s49 = sphi 0, %s33
      %s53 = sphi 0, %s53
      %s55 = sphi 0, %s53
      %s56 = sphi 0, %s55
      %s70 = sphi 0, %s56
      %s74 = sphi 0, %s74
      %s76 = sphi 0, %s74
      %s77 = sphi 0, %s76
      %s91 = sphi 0, %s77
      %s95 = sphi 0, %s95
      %s97 = sphi 0, %s95
      %s98 = sphi 0, %s97
      %s112 = sphi 0, %s98
      %s116 = sphi 0, %s116
      %s118 = sphi 0, %s116
      %s119 = sphi 0, %s118
      %s133 = sphi 0, %s119
      %s137 = sphi 0, %s137
      %s139 = sphi 0, %s137
      %s140 = sphi 0, %s139
      %s154 = sphi 0, %s140
      %s158 = sphi 0, %s158
      %s160 = sphi 0, %s158
      %s161 = sphi 0, %s160
      %s175 = sphi 0, %s161
      %s181 = sphi 0, %s183
      %s184 = sphi 0, %s181
      %s185 = sphi 0, %s184
      %s201 = sphi 0, %s185
    $region4: #{classification_network_forward.1} parent=1 // loop_header_branch
      %22 = sbr.rel (%p20) target = $region8
    $region5: #{classification_network_forward.1} parent=1 // loop_body
      %s24 = ssub.s32 %s19, 1
      %s25 = ssub.s32 %s19, 2
      %s26 = sadd.s32 %s19, 1
      %s27 = ssub.s32 %s19, %s26
      %p28 = scmp.eq.s32.totalorder %s27, 0
      %s30 = sadd.s32 %s29, 1
      %s31 = scalar_select %p28, %s29, %s30
      %p34 = pneg %p28
      %p35 = scmp.eq.s32.totalorder %s19, 1
      %p36 = por %p34, %p35
      %p37 = scmp.ne.s32.totalorder %s29, %s32
      %p38 = scmp.eq.s32.totalorder %s19, 0
      %p39 = por %p37, %p38
      %p40 = scmp.ne.s32.totalorder %s29, %s32
      %p41 = scmp.eq.s32.totalorder %s24, 1
      %p42 = por %p40, %p41
      %p43 = scmp.ne.s32.totalorder %s32, %s33
      %p44 = scmp.eq.s32.totalorder %s24, 0
      %p45 = por %p43, %p44
      %p46 = scmp.ne.s32.totalorder %s32, %s33
      %p47 = scmp.eq.s32.totalorder %s25, 1
      %p48 = por %p46, %p47
      %p50 = scmp.ne.s32.totalorder %s33, %s49
      %p51 = scmp.eq.s32.totalorder %s25, 0
      %p52 = por %p50, %p51
      %s54 = sadd.s32 %s53, 1
      %p57 = scmp.eq.s32.totalorder %s19, 1
      %p58 = scmp.ne.s32.totalorder %s53, %s55
      %p59 = scmp.eq.s32.totalorder %s19, 0
      %p60 = por %p58, %p59
      %p61 = scmp.ne.s32.totalorder %s53, %s55
      %p62 = scmp.eq.s32.totalorder %s24, 1
      %p63 = por %p61, %p62
      %p64 = scmp.ne.s32.totalorder %s55, %s56
      %p65 = scmp.eq.s32.totalorder %s24, 0
      %p66 = por %p64, %p65
      %p67 = scmp.ne.s32.totalorder %s55, %s56
      %p68 = scmp.eq.s32.totalorder %s25, 1
      %p69 = por %p67, %p68
      %p71 = scmp.ne.s32.totalorder %s56, %s70
      %p72 = scmp.eq.s32.totalorder %s25, 0
      %p73 = por %p71, %p72
      %s75 = sadd.s32 %s74, 1
      %p78 = scmp.eq.s32.totalorder %s19, 1
      %p79 = scmp.ne.s32.totalorder %s74, %s76
      %p80 = scmp.eq.s32.totalorder %s19, 0
      %p81 = por %p79, %p80
      %p82 = scmp.ne.s32.totalorder %s74, %s76
      %p83 = scmp.eq.s32.totalorder %s24, 1
      %p84 = por %p82, %p83
      %p85 = scmp.ne.s32.totalorder %s76, %s77
      %p86 = scmp.eq.s32.totalorder %s24, 0
      %p87 = por %p85, %p86
      %p88 = scmp.ne.s32.totalorder %s76, %s77
      %p89 = scmp.eq.s32.totalorder %s25, 1
      %p90 = por %p88, %p89
      %p92 = scmp.ne.s32.totalorder %s77, %s91
      %p93 = scmp.eq.s32.totalorder %s25, 0
      %p94 = por %p92, %p93
      %s96 = sadd.s32 %s95, 1
      %p99 = scmp.eq.s32.totalorder %s19, 1
      %p100 = scmp.ne.s32.totalorder %s95, %s97
      %p101 = scmp.eq.s32.totalorder %s19, 0
      %p102 = por %p100, %p101
      %p103 = scmp.ne.s32.totalorder %s95, %s97
      %p104 = scmp.eq.s32.totalorder %s24, 1
      %p105 = por %p103, %p104
      %p106 = scmp.ne.s32.totalorder %s97, %s98
      %p107 = scmp.eq.s32.totalorder %s24, 0
      %p108 = por %p106, %p107
      %p109 = scmp.ne.s32.totalorder %s97, %s98
      %p110 = scmp.eq.s32.totalorder %s25, 1
      %p111 = por %p109, %p110
      %p113 = scmp.ne.s32.totalorder %s98, %s112
      %p114 = scmp.eq.s32.totalorder %s25, 0
      %p115 = por %p113, %p114
      %s117 = sadd.s32 %s116, 1
      %p120 = scmp.eq.s32.totalorder %s19, 1
      %p121 = scmp.ne.s32.totalorder %s116, %s118
      %p122 = scmp.eq.s32.totalorder %s19, 0
      %p123 = por %p121, %p122
      %p124 = scmp.ne.s32.totalorder %s116, %s118
      %p125 = scmp.eq.s32.totalorder %s24, 1
      %p126 = por %p124, %p125
      %p127 = scmp.ne.s32.totalorder %s118, %s119
      %p128 = scmp.eq.s32.totalorder %s24, 0
      %p129 = por %p127, %p128
      %p130 = scmp.ne.s32.totalorder %s118, %s119
      %p131 = scmp.eq.s32.totalorder %s25, 1
      %p132 = por %p130, %p131
      %p134 = scmp.ne.s32.totalorder %s119, %s133
      %p135 = scmp.eq.s32.totalorder %s25, 0
      %p136 = por %p134, %p135
      %s138 = sadd.s32 %s137, 1
      %p141 = scmp.eq.s32.totalorder %s19, 1
      %p142 = scmp.ne.s32.totalorder %s137, %s139
      %p143 = scmp.eq.s32.totalorder %s19, 0
      %p144 = por %p142, %p143
      %p145 = scmp.ne.s32.totalorder %s137, %s139
      %p146 = scmp.eq.s32.totalorder %s24, 1
      %p147 = por %p145, %p146
      %p148 = scmp.ne.s32.totalorder %s139, %s140
      %p149 = scmp.eq.s32.totalorder %s24, 0
      %p150 = por %p148, %p149
      %p151 = scmp.ne.s32.totalorder %s139, %s140
      %p152 = scmp.eq.s32.totalorder %s25, 1
      %p153 = por %p151, %p152
      %p155 = scmp.ne.s32.totalorder %s140, %s154
      %p156 = scmp.eq.s32.totalorder %s25, 0
      %p157 = por %p155, %p156
      %s159 = sadd.s32 %s158, 1
      %p162 = scmp.eq.s32.totalorder %s19, 1
      %p163 = scmp.ne.s32.totalorder %s158, %s160
      %p164 = scmp.eq.s32.totalorder %s19, 0
      %p165 = por %p163, %p164
      %p166 = scmp.ne.s32.totalorder %s158, %s160
      %p167 = scmp.eq.s32.totalorder %s24, 1
      %p168 = por %p166, %p167
      %p169 = scmp.ne.s32.totalorder %s160, %s161
      %p170 = scmp.eq.s32.totalorder %s24, 0
      %p171 = por %p169, %p170
      %p172 = scmp.ne.s32.totalorder %s160, %s161
      %p173 = scmp.eq.s32.totalorder %s25, 1
      %p174 = por %p172, %p173
      %p176 = scmp.ne.s32.totalorder %s161, %s175
      %p177 = scmp.eq.s32.totalorder %s25, 0
      %p178 = por %p176, %p177
      %s179 = ssub.s32 %s19, %s26
      %p180 = scmp.eq.s32.totalorder %s179, 0
      %s182 = sadd.s32 %s181, 1
      %s183 = scalar_select %p180, %s181, %s182
      %p186 = pneg %p180
      %p187 = scmp.eq.s32.totalorder %s19, 1
      %p188 = por %p186, %p187
      %p189 = scmp.ne.s32.totalorder %s181, %s184
      %p190 = scmp.eq.s32.totalorder %s19, 0
      %p191 = por %p189, %p190
      %p192 = scmp.ne.s32.totalorder %s181, %s184
      %p193 = scmp.eq.s32.totalorder %s24, 1
      %p194 = por %p192, %p193
      %p195 = scmp.ne.s32.totalorder %s184, %s185
      %p196 = scmp.eq.s32.totalorder %s24, 0
      %p197 = por %p195, %p196
      %p198 = scmp.ne.s32.totalorder %s184, %s185
      %p199 = scmp.eq.s32.totalorder %s25, 1
      %p200 = por %p198, %p199
      %p202 = scmp.ne.s32.totalorder %s185, %s201
      %p203 = scmp.eq.s32.totalorder %s25, 0
      %p204 = por %p202, %p203
      %p205 = scmp.le.s32.totalorder 1, %s19
      %p206 = scmp.lt.s32.totalorder %s19, 3
      %p207 = pnand %p205, %p206
      %p208 = pneg %p207
      // Predicated region
      $region9: #{classification_network_forward.1} parent=5 // pred_check
        _
      $region10: #{classification_network_forward.1} parent=5 // pred_check_branch
        %210 = sbr.rel (%p207) target = $region12
      $region11: #{classification_network_forward.1} parent=5 // pred_region
        %s211 = ssub.s32 %s19, 1
        // Predicated region
        $region13: #{classification_network_forward.1} parent=11 // pred_check
          %p212 = pneg %p66
        $region14: #{classification_network_forward.1} parent=11 // pred_check_branch
          %214 = sbr.rel (%p212) target = $region16
        $region15: #{classification_network_forward.1} parent=11 // pred_region
          %s216 = ssub.s32 1024, 1024
          %217 = vsyncadd [#allocation6], %s216
          %s218 = sshll.u32 [#allocation5], 4
          %s219 = int_to_ptr.vmem [resolvable:$true] %s218
          %224 = dma.hbm_to_vmem [thread:$0]  %s1, 1024, %s219, [#allocation6], 64, 64, 4
        $region16: #{classification_network_forward.1} parent=11 // pred_fallthru
          _
        // Predicated region
        $region17: #{classification_network_forward.1} parent=11 // pred_check
          %p225 = pneg %p87
        $region18: #{classification_network_forward.1} parent=11 // pred_check_branch
          %227 = sbr.rel (%p225) target = $region20
        $region19: #{classification_network_forward.1} parent=11 // pred_region
          _
        $region20: #{classification_network_forward.1} parent=11 // pred_fallthru
          _
        // Predicated region
        $region21: #{classification_network_forward.1} parent=11 // pred_check
          %p228 = pneg %p108
        $region22: #{classification_network_forward.1} parent=11 // pred_check_branch
          %230 = sbr.rel (%p228) target = $region24
        $region23: #{classification_network_forward.1} parent=11 // pred_region
          %s232 = ssub.s32 1024, 1024
          %233 = vsyncadd [#allocation6], %s232
          %s234 = sshll.u32 [#allocation7], 4
          %s235 = int_to_ptr.vmem [resolvable:$true] %s234
          %240 = dma.hbm_to_vmem [thread:$0]  %s3, 1024, %s235, [#allocation6], 64, 64, 4
        $region24: #{classification_network_forward.1} parent=11 // pred_fallthru
          _
        // Predicated region
        $region25: #{classification_network_forward.1} parent=11 // pred_check
          %p241 = pneg %p129
        $region26: #{classification_network_forward.1} parent=11 // pred_check_branch
          %243 = sbr.rel (%p241) target = $region28
        $region27: #{classification_network_forward.1} parent=11 // pred_region
          _
        $region28: #{classification_network_forward.1} parent=11 // pred_fallthru
          _
        // Predicated region
        $region29: #{classification_network_forward.1} parent=11 // pred_check
          %p244 = pneg %p150
        $region30: #{classification_network_forward.1} parent=11 // pred_check_branch
          %246 = sbr.rel (%p244) target = $region32
        $region31: #{classification_network_forward.1} parent=11 // pred_region
          _
        $region32: #{classification_network_forward.1} parent=11 // pred_fallthru
          _
        // Predicated region
        $region33: #{classification_network_forward.1} parent=11 // pred_check
          %p247 = pneg %p171
        $region34: #{classification_network_forward.1} parent=11 // pred_check_branch
          %249 = sbr.rel (%p247) target = $region36
        $region35: #{classification_network_forward.1} parent=11 // pred_region
          _
        $region36: #{classification_network_forward.1} parent=11 // pred_fallthru
          _
      $region12: #{classification_network_forward.1} parent=5 // pred_fallthru
        _
      %p250 = scmp.lt.s32.totalorder %s19, 2
      // Predicated region
      $region37: #{classification_network_forward.1} parent=5 // pred_check
        %p251 = pneg %p250
      $region38: #{classification_network_forward.1} parent=5 // pred_check_branch
        %253 = sbr.rel (%p251) target = $region40
      $region39: #{classification_network_forward.1} parent=5 // pred_region
        // Predicated region
        $region41: #{classification_network_forward.1} parent=39 // pred_check
          %p254 = pneg %p39
        $region42: #{classification_network_forward.1} parent=39 // pred_check_branch
          %256 = sbr.rel (%p254) target = $region44
        $region43: #{classification_network_forward.1} parent=39 // pred_region
          %s257 = sand.u32 %s29, 1
          %s258 = scalar_lea.sflag [#allocation4], %s257
          %s259 = sand.u32 %s29, 1
          %s260 = smul.addr %s259, 256
          %s261 = scalar_lea.vmem [#allocation3], %s260
          %s262 = smul.u32 32, %s19
          %s263 = ssub.s32 38, %s262
          %p264 = scmp.lt.s32.totalorder %s263, 32
          %s265 = scalar_select %p264, %s263, 32
          %s266 = smul.u32 128, %s265
          %s268 = ssub.s32 4096, %s266
          %269 = vsyncadd %s258, %s268
          %p270 = scmp.ne.s32.totalorder 0, %s266
          %s271 = smul.addr %s262, 128
          %s272 = scalar_lea.hbm %s0, %s271
          %s273 = smul.u32 8, %s265
          %s274 = sshll.u32 %s261, 4
          %s275 = int_to_ptr.vmem [resolvable:$true] %s274
          %s276 = sshll.u32 %s273, 4
          %280 = dma.hbm_to_vmem [thread:$0]  (%p270), %s272, %s276, %s275, %s258, 128, 128, 8
        $region44: #{classification_network_forward.1} parent=39 // pred_fallthru
          _
      $region40: #{classification_network_forward.1} parent=5 // pred_fallthru
        _
      %p281 = scmp.le.s32.totalorder 1, %s19
      %p282 = scmp.lt.s32.totalorder %s19, 3
      %p283 = pnand %p281, %p282
      %p284 = pneg %p283
      // Predicated region
      $region45: #{classification_network_forward.1} parent=5 // pred_check
        _
      $region46: #{classification_network_forward.1} parent=5 // pred_check_branch
        %286 = sbr.rel (%p283) target = $region48
      $region47: #{classification_network_forward.1} parent=5 // pred_region
        %s287 = ssub.s32 %s19, 1
        %s288 = sand.u32 %s32, 1
        %s289 = scalar_lea.sflag [#allocation4], %s288
        %s290 = sand.u32 %s32, 1
        %s291 = smul.addr %s290, 256
        %s292 = scalar_lea.vmem [#allocation3], %s291
        // Predicated region
        $region49: #{classification_network_forward.1} parent=47 // pred_check
          %p293 = pneg %p45
        $region50: #{classification_network_forward.1} parent=47 // pred_check_branch
          %295 = sbr.rel (%p293) target = $region52
        $region51: #{classification_network_forward.1} parent=47 // pred_region
          %296 = dma.done %s289, 4096
        $region52: #{classification_network_forward.1} parent=47 // pred_fallthru
          _
        // Predicated region
        $region53: #{classification_network_forward.1} parent=47 // pred_check
          %p297 = pneg %p66
        $region54: #{classification_network_forward.1} parent=47 // pred_check_branch
          %299 = sbr.rel (%p297) target = $region56
        $region55: #{classification_network_forward.1} parent=47 // pred_region
          %300 = dma.done [#allocation6], 1024
        $region56: #{classification_network_forward.1} parent=47 // pred_fallthru
          _
        // Predicated region
        $region57: #{classification_network_forward.1} parent=47 // pred_check
          %p301 = pneg %p108
        $region58: #{classification_network_forward.1} parent=47 // pred_check_branch
          %303 = sbr.rel (%p301) target = $region60
        $region59: #{classification_network_forward.1} parent=47 // pred_region
          %304 = dma.done [#allocation6], 1024
        $region60: #{classification_network_forward.1} parent=47 // pred_fallthru
          _
        %s305 = sand.u32 %s32, 1
        %s306 = scalar_lea.sflag [#allocation4], %s305
        %s307 = sand.u32 %s32, 1
        %s308 = smul.addr %s307, 256
        %s309 = scalar_lea.vmem [#allocation3], %s308
        %p310 = pneg %p45
        %p311 = pneg %p42
        %p312 = pneg %p66
        %p313 = pneg %p63
        %p314 = pneg %p87
        %p315 = pneg %p84
        %p316 = pneg %p108
        %p317 = pneg %p105
        %p318 = pneg %p129
        %p319 = pneg %p126
        %p320 = pneg %p150
        %p321 = pneg %p147
        %p322 = pneg %p171
        %p323 = pneg %p168
        %p324 = pneg %p197
        %p325 = pneg %p194
        %s326 = smul.u32 2, %s24
        %p327 = scmp.lt.s32.totalorder %s326, 3
        %s328 = scalar_select %p327, %s326, 3
        %s329 = scalar_lea.vmem %s7, %s328
        %s330 = smul.u32 32, %s24
        %s331 = ssub.s32 38, %s330
        %p332 = scmp.lt.s32.totalorder %s331, 32
        %s333 = scalar_select %p332, %s331, 32
        %s334 = smul.u32 128, %s333
        %s335 = smul.u32 2, %s24
        %p336 = scmp.lt.s32.totalorder %s335, 3
        %s337 = scalar_select %p336, %s335, 3
        %s338 = scalar_lea.vmem %s7, %s337
        %s339 = smul.u32 2, %s24
        %v341 = vld [vmem:[%s292] sm:$0xff]
        %v342 = vld [vmem:[%s292 + $0x8] sm:$0xff]
        %v343 = vld [vmem:[%s292 + $0x10] sm:$0xff]
        %v344 = vld [vmem:[%s292 + $0x18] sm:$0xff]
        %v345 = vld [vmem:[%s292 + $0x20] sm:$0xff]
        %v346 = vld [vmem:[%s292 + $0x28] sm:$0xff]
        %v347 = vld [vmem:[%s292 + $0x30] sm:$0xff]
        %v348 = vld [vmem:[%s292 + $0x38] sm:$0xff]
        %v349 = vld [vmem:[%s292 + $0x40] sm:$0xff]
        %v350 = vld [vmem:[%s292 + $0x48] sm:$0xff]
        %v351 = vld [vmem:[%s292 + $0x50] sm:$0xff]
        %v352 = vld [vmem:[%s292 + $0x58] sm:$0xff]
        %v353 = vld [vmem:[%s292 + $0x60] sm:$0xff]
        %v354 = vld [vmem:[%s292 + $0x68] sm:$0xff]
        %v355 = vld [vmem:[%s292 + $0x70] sm:$0xff]
        %v356 = vld [vmem:[%s292 + $0x78] sm:$0xff]
        %v357 = vld [vmem:[%s292 + $0x80] sm:$0xff]
        %v358 = vld [vmem:[%s292 + $0x88] sm:$0xff]
        %v359 = vld [vmem:[%s292 + $0x90] sm:$0xff]
        %v360 = vld [vmem:[%s292 + $0x98] sm:$0xff]
        %v361 = vld [vmem:[%s292 + $0xa0] sm:$0xff]
        %v362 = vld [vmem:[%s292 + $0xa8] sm:$0xff]
        %v363 = vld [vmem:[%s292 + $0xb0] sm:$0xff]
        %v364 = vld [vmem:[%s292 + $0xb8] sm:$0xff]
        %v365 = vld [vmem:[%s292 + $0xc0] sm:$0xff]
        %v366 = vld [vmem:[%s292 + $0xc8] sm:$0xff]
        %v367 = vld [vmem:[%s292 + $0xd0] sm:$0xff]
        %v368 = vld [vmem:[%s292 + $0xd8] sm:$0xff]
        %v369 = vld [vmem:[%s292 + $0xe0] sm:$0xff]
        %v370 = vld [vmem:[%s292 + $0xe8] sm:$0xff]
        %v371 = vld [vmem:[%s292 + $0xf0] sm:$0xff]
        %v372 = vld [vmem:[%s292 + $0xf8] sm:$0xff]
        %v373 = vpack.c.bf16 %v342, %v341
        %v374 = vpack.c.bf16 %v344, %v343
        %v375 = vpack.c.bf16 %v346, %v345
        %v376 = vpack.c.bf16 %v348, %v347
        %v377 = vpack.c.bf16 %v350, %v349
        %v378 = vpack.c.bf16 %v352, %v351
        %v379 = vpack.c.bf16 %v354, %v353
        %v380 = vpack.c.bf16 %v356, %v355
        %v381 = vpack.c.bf16 %v358, %v357
        %v382 = vpack.c.bf16 %v360, %v359
        %v383 = vpack.c.bf16 %v362, %v361
        %v384 = vpack.c.bf16 %v364, %v363
        %v385 = vpack.c.bf16 %v366, %v365
        %v386 = vpack.c.bf16 %v368, %v367
        %v387 = vpack.c.bf16 %v370, %v369
        %v388 = vpack.c.bf16 %v372, %v371
        %v389 = vld [vmem:[#allocation5] sm:$0xf]
        %v390 = vld [vmem:[#allocation5 + $0x4] sm:$0xf]
        %v391 = vld [vmem:[#allocation5 + $0x8] sm:$0xf]
        %v392 = vld [vmem:[#allocation5 + $0xc] sm:$0xf]
        %v393 = vld [vmem:[#allocation5 + $0x10] sm:$0xf]
        %v394 = vld [vmem:[#allocation5 + $0x14] sm:$0xf]
        %v395 = vld [vmem:[#allocation5 + $0x18] sm:$0xf]
        %v396 = vld [vmem:[#allocation5 + $0x1c] sm:$0xf]
        %v397 = vld [vmem:[#allocation5 + $0x20] sm:$0xf]
        %v398 = vld [vmem:[#allocation5 + $0x24] sm:$0xf]
        %v399 = vld [vmem:[#allocation5 + $0x28] sm:$0xf]
        %v400 = vld [vmem:[#allocation5 + $0x2c] sm:$0xf]
        %v401 = vld [vmem:[#allocation5 + $0x30] sm:$0xf]
        %v402 = vld [vmem:[#allocation5 + $0x34] sm:$0xf]
        %v403 = vld [vmem:[#allocation5 + $0x38] sm:$0xf]
        %v404 = vld [vmem:[#allocation5 + $0x3c] sm:$0xf]
        %v405 = vld [vmem:[%s2] sm:$0x1]
        %v407 = vlaneseq
        %v408 = vshrl.u32 %v407, 7
        %v409 = vsub.s32 0, %v408
        %v410 = vrot.slane %v405, %v409
        %v428 = vunpack.c.l.b16 %v389
        %v429 = vunpack.c.l.b16 %v390
        %v430 = vunpack.c.l.b16 %v391
        %v431 = vunpack.c.l.b16 %v392
        %v432 = vunpack.c.l.b16 %v393
        %v433 = vunpack.c.l.b16 %v394
        %v434 = vunpack.c.l.b16 %v395
        %v435 = vunpack.c.l.b16 %v396
        %v436 = vunpack.c.l.b16 %v397
        %v437 = vunpack.c.l.b16 %v398
        %v438 = vunpack.c.l.b16 %v399
        %v439 = vunpack.c.l.b16 %v400
        %v440 = vunpack.c.l.b16 %v401
        %v441 = vunpack.c.l.b16 %v402
        %v442 = vunpack.c.l.b16 %v403
        %v443 = vunpack.c.l.b16 %v404
        %v444 = vpack.c.b16 %v429, %v428
        %v445 = vpack.c.b16 %v431, %v430
        %v446 = vpack.c.b16 %v433, %v432
        %v447 = vpack.c.b16 %v435, %v434
        %v448 = vpack.c.b16 %v437, %v436
        %v449 = vpack.c.b16 %v439, %v438
        %v450 = vpack.c.b16 %v441, %v440
        %v451 = vpack.c.b16 %v443, %v442
        %460 = vmatprep.subr.bf16.mxu0 0
        %461 = vmatpush1.bf16.msra.mxu0 %v451
        %462 = vmatprep.subr.bf16.mxu0 0
        %463 = vmatpush1.bf16.msra.mxu0 %v450
        %464 = vmatprep.subr.bf16.mxu0 0
        %465 = vmatpush1.bf16.msra.mxu0 %v449
        %466 = vmatprep.subr.bf16.mxu0 0
        %467 = vmatpush1.bf16.msra.mxu0 %v448
        %468 = vmatprep.subr.bf16.mxu0 0
        %469 = vmatpush1.bf16.msra.mxu0 %v447
        %470 = vmatprep.subr.bf16.mxu0 0
        %471 = vmatpush1.bf16.msra.mxu0 %v446
        %472 = vmatprep.subr.bf16.mxu0 0
        %473 = vmatpush1.bf16.msra.mxu0 %v445
        %474 = vmatprep.subr.bf16.mxu0 0
        %475 = vmatpush1.bf16.msra.mxu0 %v444
        %476 = vmatprep.subr.bf16.mxu0 0
        %477 = vmatpush2.bf16.msra.mxu0 0
        %478 = vmatprep.subr.bf16.mxu0 0
        %479 = vmatpush2.bf16.msra.mxu0 0
        %480 = vmatprep.subr.bf16.mxu0 0
        %481 = vmatpush2.bf16.msra.mxu0 0
        %482 = vmatprep.subr.bf16.mxu0 0
        %483 = vmatpush2.bf16.msra.mxu0 0
        %484 = vmatprep.subr.bf16.mxu0 0
        %485 = vmatpush2.bf16.msra.mxu0 0
        %486 = vmatprep.subr.bf16.mxu0 0
        %487 = vmatpush2.bf16.msra.mxu0 0
        %488 = vmatprep.subr.bf16.mxu0 0
        %489 = vmatpush2.bf16.msra.mxu0 0
        %490 = vmatprep.subr.bf16.mxu0 0
        %491 = vmatpush2.bf16.msra.mxu0 0
        %492 = vmatprep.mubr.bf16.mxu0 0
        %493 = vmatmul.mubr.bf16.gmra.mxu0 %v373
        %v494 = vpop.f32.mrf.mxu0
        %v495 = vadd.f32 %v410, %v494
        %v496 = vpop.f32.mrf.mxu0
        %v497 = vpop.f32.mrf.mxu0
        %v498 = vadd.f32 %v410, %v497
        %v499 = vpop.f32.mrf.mxu0
        %500 = vmatprep.mubr.bf16.mxu0 0
        %501 = vmatmul.mubr.bf16.gmra.mxu0 %v374
        %v502 = vpop.f32.mrf.mxu0
        %v503 = vadd.f32 %v410, %v502
        %v504 = vpop.f32.mrf.mxu0
        %v505 = vpop.f32.mrf.mxu0
        %v506 = vadd.f32 %v410, %v505
        %v507 = vpop.f32.mrf.mxu0
        %508 = vmatprep.mubr.bf16.mxu0 0
        %509 = vmatmul.mubr.bf16.gmra.mxu0 %v375
        %v510 = vpop.f32.mrf.mxu0
        %v511 = vadd.f32 %v410, %v510
        %v512 = vpop.f32.mrf.mxu0
        %v513 = vpop.f32.mrf.mxu0
        %v514 = vadd.f32 %v410, %v513
        %v515 = vpop.f32.mrf.mxu0
        %516 = vmatprep.mubr.bf16.mxu0 0
        %517 = vmatmul.mubr.bf16.gmra.mxu0 %v376
        %v518 = vpop.f32.mrf.mxu0
        %v519 = vadd.f32 %v410, %v518
        %v520 = vpop.f32.mrf.mxu0
        %v521 = vpop.f32.mrf.mxu0
        %v522 = vadd.f32 %v410, %v521
        %v523 = vpop.f32.mrf.mxu0
        %524 = vmatprep.mubr.bf16.mxu0 0
        %525 = vmatmul.mubr.bf16.gmra.mxu0 %v377
        %v526 = vpop.f32.mrf.mxu0
        %v527 = vadd.f32 %v410, %v526
        %v528 = vpop.f32.mrf.mxu0
        %v529 = vpop.f32.mrf.mxu0
        %v530 = vadd.f32 %v410, %v529
        %v531 = vpop.f32.mrf.mxu0
        %532 = vmatprep.mubr.bf16.mxu0 0
        %533 = vmatmul.mubr.bf16.gmra.mxu0 %v378
        %v534 = vpop.f32.mrf.mxu0
        %v535 = vadd.f32 %v410, %v534
        %v536 = vpop.f32.mrf.mxu0
        %v537 = vpop.f32.mrf.mxu0
        %v538 = vadd.f32 %v410, %v537
        %v539 = vpop.f32.mrf.mxu0
        %540 = vmatprep.mubr.bf16.mxu0 0
        %541 = vmatmul.mubr.bf16.gmra.mxu0 %v379
        %v542 = vpop.f32.mrf.mxu0
        %v543 = vadd.f32 %v410, %v542
        %v544 = vpop.f32.mrf.mxu0
        %v545 = vpop.f32.mrf.mxu0
        %v546 = vadd.f32 %v410, %v545
        %v547 = vpop.f32.mrf.mxu0
        %548 = vmatprep.mubr.bf16.mxu0 0
        %549 = vmatmul.mubr.bf16.gmra.mxu0 %v380
        %v550 = vpop.f32.mrf.mxu0
        %v551 = vadd.f32 %v410, %v550
        %v552 = vpop.f32.mrf.mxu0
        %v553 = vpop.f32.mrf.mxu0
        %v554 = vadd.f32 %v410, %v553
        %v555 = vpop.f32.mrf.mxu0
        %556 = vmatprep.mubr.bf16.mxu0 0
        %557 = vmatmul.mubr.bf16.gmra.mxu0 %v381
        %v558 = vpop.f32.mrf.mxu0
        %v559 = vadd.f32 %v410, %v558
        %v560 = vpop.f32.mrf.mxu0
        %v561 = vpop.f32.mrf.mxu0
        %v562 = vadd.f32 %v410, %v561
        %v563 = vpop.f32.mrf.mxu0
        %564 = vmatprep.mubr.bf16.mxu0 0
        %565 = vmatmul.mubr.bf16.gmra.mxu0 %v382
        %v566 = vpop.f32.mrf.mxu0
        %v567 = vadd.f32 %v410, %v566
        %v568 = vpop.f32.mrf.mxu0
        %v569 = vpop.f32.mrf.mxu0
        %v570 = vadd.f32 %v410, %v569
        %v571 = vpop.f32.mrf.mxu0
        %572 = vmatprep.mubr.bf16.mxu0 0
        %573 = vmatmul.mubr.bf16.gmra.mxu0 %v383
        %v574 = vpop.f32.mrf.mxu0
        %v575 = vadd.f32 %v410, %v574
        %v576 = vpop.f32.mrf.mxu0
        %v577 = vpop.f32.mrf.mxu0
        %v578 = vadd.f32 %v410, %v577
        %v579 = vpop.f32.mrf.mxu0
        %580 = vmatprep.mubr.bf16.mxu0 0
        %581 = vmatmul.mubr.bf16.gmra.mxu0 %v384
        %v582 = vpop.f32.mrf.mxu0
        %v583 = vadd.f32 %v410, %v582
        %v584 = vpop.f32.mrf.mxu0
        %v585 = vpop.f32.mrf.mxu0
        %v586 = vadd.f32 %v410, %v585
        %v587 = vpop.f32.mrf.mxu0
        %588 = vmatprep.mubr.bf16.mxu0 0
        %589 = vmatmul.mubr.bf16.gmra.mxu0 %v385
        %v590 = vpop.f32.mrf.mxu0
        %v591 = vadd.f32 %v410, %v590
        %v592 = vpop.f32.mrf.mxu0
        %v593 = vpop.f32.mrf.mxu0
        %v594 = vadd.f32 %v410, %v593
        %v595 = vpop.f32.mrf.mxu0
        %596 = vmatprep.mubr.bf16.mxu0 0
        %597 = vmatmul.mubr.bf16.gmra.mxu0 %v386
        %v598 = vpop.f32.mrf.mxu0
        %v599 = vadd.f32 %v410, %v598
        %v600 = vpop.f32.mrf.mxu0
        %v601 = vpop.f32.mrf.mxu0
        %v602 = vadd.f32 %v410, %v601
        %v603 = vpop.f32.mrf.mxu0
        %604 = vmatprep.mubr.bf16.mxu0 0
        %605 = vmatmul.mubr.bf16.gmra.mxu0 %v387
        %v606 = vpop.f32.mrf.mxu0
        %v607 = vadd.f32 %v410, %v606
        %v608 = vpop.f32.mrf.mxu0
        %v609 = vpop.f32.mrf.mxu0
        %v610 = vadd.f32 %v410, %v609
        %v611 = vpop.f32.mrf.mxu0
        %612 = vmatprep.mubr.bf16.mxu0 0
        %613 = vmatmul.mubr.bf16.gmra.mxu0 %v388
        %v614 = vpop.f32.mrf.mxu0
        %v615 = vadd.f32 %v410, %v614
        %v616 = vpop.f32.mrf.mxu0
        %v617 = vpop.f32.mrf.mxu0
        %v618 = vadd.f32 %v410, %v617
        %v619 = vpop.f32.mrf.mxu0
        %620 = vdwg.mxu0
        %v621 = vmax.f32 %v495, 0.0
        %v622 = vmax.f32 %v498, 0.0
        %v623 = vmax.f32 %v503, 0.0
        %v624 = vmax.f32 %v506, 0.0
        %v625 = vmax.f32 %v511, 0.0
        %v626 = vmax.f32 %v514, 0.0
        %v627 = vmax.f32 %v519, 0.0
        %v628 = vmax.f32 %v522, 0.0
        %v629 = vmax.f32 %v527, 0.0
        %v630 = vmax.f32 %v530, 0.0
        %v631 = vmax.f32 %v535, 0.0
        %v632 = vmax.f32 %v538, 0.0
        %v633 = vmax.f32 %v543, 0.0
        %v634 = vmax.f32 %v546, 0.0
        %v635 = vmax.f32 %v551, 0.0
        %v636 = vmax.f32 %v554, 0.0
        %v637 = vmax.f32 %v559, 0.0
        %v638 = vmax.f32 %v562, 0.0
        %v639 = vmax.f32 %v567, 0.0
        %v640 = vmax.f32 %v570, 0.0
        %v641 = vmax.f32 %v575, 0.0
        %v642 = vmax.f32 %v578, 0.0
        %v643 = vmax.f32 %v583, 0.0
        %v644 = vmax.f32 %v586, 0.0
        %v645 = vmax.f32 %v591, 0.0
        %v646 = vmax.f32 %v594, 0.0
        %v647 = vmax.f32 %v599, 0.0
        %v648 = vmax.f32 %v602, 0.0
        %v649 = vmax.f32 %v607, 0.0
        %v650 = vmax.f32 %v610, 0.0
        %v651 = vmax.f32 %v615, 0.0
        %v652 = vmax.f32 %v618, 0.0
        %v653 = vpack.c.bf16 %v622, %v621
        %v654 = vpack.c.bf16 %v624, %v623
        %v655 = vpack.c.bf16 %v626, %v625
        %v656 = vpack.c.bf16 %v628, %v627
        %v657 = vpack.c.bf16 %v630, %v629
        %v658 = vpack.c.bf16 %v632, %v631
        %v659 = vpack.c.bf16 %v634, %v633
        %v660 = vpack.c.bf16 %v636, %v635
        %v661 = vpack.c.bf16 %v638, %v637
        %v662 = vpack.c.bf16 %v640, %v639
        %v663 = vpack.c.bf16 %v642, %v641
        %v664 = vpack.c.bf16 %v644, %v643
        %v665 = vpack.c.bf16 %v646, %v645
        %v666 = vpack.c.bf16 %v648, %v647
        %v667 = vpack.c.bf16 %v650, %v649
        %v668 = vpack.c.bf16 %v652, %v651
        %v669 = vld [vmem:[#allocation7] sm:$0xf]
        %v670 = vld [vmem:[#allocation7 + $0x4] sm:$0xf]
        %v671 = vld [vmem:[#allocation7 + $0x8] sm:$0xf]
        %v672 = vld [vmem:[#allocation7 + $0xc] sm:$0xf]
        %v673 = vld [vmem:[#allocation7 + $0x10] sm:$0xf]
        %v674 = vld [vmem:[#allocation7 + $0x14] sm:$0xf]
        %v675 = vld [vmem:[#allocation7 + $0x18] sm:$0xf]
        %v676 = vld [vmem:[#allocation7 + $0x1c] sm:$0xf]
        %v677 = vld [vmem:[#allocation7 + $0x20] sm:$0xf]
        %v678 = vld [vmem:[#allocation7 + $0x24] sm:$0xf]
        %v679 = vld [vmem:[#allocation7 + $0x28] sm:$0xf]
        %v680 = vld [vmem:[#allocation7 + $0x2c] sm:$0xf]
        %v681 = vld [vmem:[#allocation7 + $0x30] sm:$0xf]
        %v682 = vld [vmem:[#allocation7 + $0x34] sm:$0xf]
        %v683 = vld [vmem:[#allocation7 + $0x38] sm:$0xf]
        %v684 = vld [vmem:[#allocation7 + $0x3c] sm:$0xf]
        %v685 = vld [vmem:[%s4] sm:$0x1]
        %v687 = vlaneseq
        %v688 = vshrl.u32 %v687, 7
        %v689 = vsub.s32 0, %v688
        %v690 = vrot.slane %v685, %v689
        %v708 = vunpack.c.l.b16 %v669
        %v709 = vunpack.c.l.b16 %v670
        %v710 = vunpack.c.l.b16 %v671
        %v711 = vunpack.c.l.b16 %v672
        %v712 = vunpack.c.l.b16 %v673
        %v713 = vunpack.c.l.b16 %v674
        %v714 = vunpack.c.l.b16 %v675
        %v715 = vunpack.c.l.b16 %v676
        %v716 = vunpack.c.l.b16 %v677
        %v717 = vunpack.c.l.b16 %v678
        %v718 = vunpack.c.l.b16 %v679
        %v719 = vunpack.c.l.b16 %v680
        %v720 = vunpack.c.l.b16 %v681
        %v721 = vunpack.c.l.b16 %v682
        %v722 = vunpack.c.l.b16 %v683
        %v723 = vunpack.c.l.b16 %v684
        %v724 = vpack.c.b16 %v709, %v708
        %v725 = vpack.c.b16 %v711, %v710
        %v726 = vpack.c.b16 %v713, %v712
        %v727 = vpack.c.b16 %v715, %v714
        %v728 = vpack.c.b16 %v717, %v716
        %v729 = vpack.c.b16 %v719, %v718
        %v730 = vpack.c.b16 %v721, %v720
        %v731 = vpack.c.b16 %v723, %v722
        %740 = vmatprep.subr.bf16.mxu0 0
        %741 = vmatpush1.bf16.msra.mxu0 %v731
        %742 = vmatprep.subr.bf16.mxu0 0
        %743 = vmatpush1.bf16.msra.mxu0 %v730
        %744 = vmatprep.subr.bf16.mxu0 0
        %745 = vmatpush1.bf16.msra.mxu0 %v729
        %746 = vmatprep.subr.bf16.mxu0 0
        %747 = vmatpush1.bf16.msra.mxu0 %v728
        %748 = vmatprep.subr.bf16.mxu0 0
        %749 = vmatpush1.bf16.msra.mxu0 %v727
        %750 = vmatprep.subr.bf16.mxu0 0
        %751 = vmatpush1.bf16.msra.mxu0 %v726
        %752 = vmatprep.subr.bf16.mxu0 0
        %753 = vmatpush1.bf16.msra.mxu0 %v725
        %754 = vmatprep.subr.bf16.mxu0 0
        %755 = vmatpush1.bf16.msra.mxu0 %v724
        %756 = vmatprep.subr.bf16.mxu0 0
        %757 = vmatpush2.bf16.msra.mxu0 0
        %758 = vmatprep.subr.bf16.mxu0 0
        %759 = vmatpush2.bf16.msra.mxu0 0
        %760 = vmatprep.subr.bf16.mxu0 0
        %761 = vmatpush2.bf16.msra.mxu0 0
        %762 = vmatprep.subr.bf16.mxu0 0
        %763 = vmatpush2.bf16.msra.mxu0 0
        %764 = vmatprep.subr.bf16.mxu0 0
        %765 = vmatpush2.bf16.msra.mxu0 0
        %766 = vmatprep.subr.bf16.mxu0 0
        %767 = vmatpush2.bf16.msra.mxu0 0
        %768 = vmatprep.subr.bf16.mxu0 0
        %769 = vmatpush2.bf16.msra.mxu0 0
        %770 = vmatprep.subr.bf16.mxu0 0
        %771 = vmatpush2.bf16.msra.mxu0 0
        %772 = vmatprep.mubr.bf16.mxu0 0
        %773 = vmatmul.mubr.bf16.gmra.mxu0 %v653
        %v774 = vpop.f32.mrf.mxu0
        %v775 = vadd.f32 %v690, %v774
        %v776 = vpop.f32.mrf.mxu0
        %v777 = vpop.f32.mrf.mxu0
        %v778 = vadd.f32 %v690, %v777
        %v779 = vpop.f32.mrf.mxu0
        %780 = vmatprep.mubr.bf16.mxu0 0
        %781 = vmatmul.mubr.bf16.gmra.mxu0 %v654
        %v782 = vpop.f32.mrf.mxu0
        %v783 = vadd.f32 %v690, %v782
        %v784 = vpop.f32.mrf.mxu0
        %v785 = vpop.f32.mrf.mxu0
        %v786 = vadd.f32 %v690, %v785
        %v787 = vpop.f32.mrf.mxu0
        %788 = vmatprep.mubr.bf16.mxu0 0
        %789 = vmatmul.mubr.bf16.gmra.mxu0 %v655
        %v790 = vpop.f32.mrf.mxu0
        %v791 = vadd.f32 %v690, %v790
        %v792 = vpop.f32.mrf.mxu0
        %v793 = vpop.f32.mrf.mxu0
        %v794 = vadd.f32 %v690, %v793
        %v795 = vpop.f32.mrf.mxu0
        %796 = vmatprep.mubr.bf16.mxu0 0
        %797 = vmatmul.mubr.bf16.gmra.mxu0 %v656
        %v798 = vpop.f32.mrf.mxu0
        %v799 = vadd.f32 %v690, %v798
        %v800 = vpop.f32.mrf.mxu0
        %v801 = vpop.f32.mrf.mxu0
        %v802 = vadd.f32 %v690, %v801
        %v803 = vpop.f32.mrf.mxu0
        %804 = vmatprep.mubr.bf16.mxu0 0
        %805 = vmatmul.mubr.bf16.gmra.mxu0 %v657
        %v806 = vpop.f32.mrf.mxu0
        %v807 = vadd.f32 %v690, %v806
        %v808 = vpop.f32.mrf.mxu0
        %v809 = vpop.f32.mrf.mxu0
        %v810 = vadd.f32 %v690, %v809
        %v811 = vpop.f32.mrf.mxu0
        %812 = vmatprep.mubr.bf16.mxu0 0
        %813 = vmatmul.mubr.bf16.gmra.mxu0 %v658
        %v814 = vpop.f32.mrf.mxu0
        %v815 = vadd.f32 %v690, %v814
        %v816 = vpop.f32.mrf.mxu0
        %v817 = vpop.f32.mrf.mxu0
        %v818 = vadd.f32 %v690, %v817
        %v819 = vpop.f32.mrf.mxu0
        %820 = vmatprep.mubr.bf16.mxu0 0
        %821 = vmatmul.mubr.bf16.gmra.mxu0 %v659
        %v822 = vpop.f32.mrf.mxu0
        %v823 = vadd.f32 %v690, %v822
        %v824 = vpop.f32.mrf.mxu0
        %v825 = vpop.f32.mrf.mxu0
        %v826 = vadd.f32 %v690, %v825
        %v827 = vpop.f32.mrf.mxu0
        %828 = vmatprep.mubr.bf16.mxu0 0
        %829 = vmatmul.mubr.bf16.gmra.mxu0 %v660
        %v830 = vpop.f32.mrf.mxu0
        %v831 = vadd.f32 %v690, %v830
        %v832 = vpop.f32.mrf.mxu0
        %v833 = vpop.f32.mrf.mxu0
        %v834 = vadd.f32 %v690, %v833
        %v835 = vpop.f32.mrf.mxu0
        %836 = vmatprep.mubr.bf16.mxu0 0
        %837 = vmatmul.mubr.bf16.gmra.mxu0 %v661
        %v838 = vpop.f32.mrf.mxu0
        %v839 = vadd.f32 %v690, %v838
        %v840 = vpop.f32.mrf.mxu0
        %v841 = vpop.f32.mrf.mxu0
        %v842 = vadd.f32 %v690, %v841
        %v843 = vpop.f32.mrf.mxu0
        %844 = vmatprep.mubr.bf16.mxu0 0
        %845 = vmatmul.mubr.bf16.gmra.mxu0 %v662
        %v846 = vpop.f32.mrf.mxu0
        %v847 = vadd.f32 %v690, %v846
        %v848 = vpop.f32.mrf.mxu0
        %v849 = vpop.f32.mrf.mxu0
        %v850 = vadd.f32 %v690, %v849
        %v851 = vpop.f32.mrf.mxu0
        %852 = vmatprep.mubr.bf16.mxu0 0
        %853 = vmatmul.mubr.bf16.gmra.mxu0 %v663
        %v854 = vpop.f32.mrf.mxu0
        %v855 = vadd.f32 %v690, %v854
        %v856 = vpop.f32.mrf.mxu0
        %v857 = vpop.f32.mrf.mxu0
        %v858 = vadd.f32 %v690, %v857
        %v859 = vpop.f32.mrf.mxu0
        %860 = vmatprep.mubr.bf16.mxu0 0
        %861 = vmatmul.mubr.bf16.gmra.mxu0 %v664
        %v862 = vpop.f32.mrf.mxu0
        %v863 = vadd.f32 %v690, %v862
        %v864 = vpop.f32.mrf.mxu0
        %v865 = vpop.f32.mrf.mxu0
        %v866 = vadd.f32 %v690, %v865
        %v867 = vpop.f32.mrf.mxu0
        %868 = vmatprep.mubr.bf16.mxu0 0
        %869 = vmatmul.mubr.bf16.gmra.mxu0 %v665
        %v870 = vpop.f32.mrf.mxu0
        %v871 = vadd.f32 %v690, %v870
        %v872 = vpop.f32.mrf.mxu0
        %v873 = vpop.f32.mrf.mxu0
        %v874 = vadd.f32 %v690, %v873
        %v875 = vpop.f32.mrf.mxu0
        %876 = vmatprep.mubr.bf16.mxu0 0
        %877 = vmatmul.mubr.bf16.gmra.mxu0 %v666
        %v878 = vpop.f32.mrf.mxu0
        %v879 = vadd.f32 %v690, %v878
        %v880 = vpop.f32.mrf.mxu0
        %v881 = vpop.f32.mrf.mxu0
        %v882 = vadd.f32 %v690, %v881
        %v883 = vpop.f32.mrf.mxu0
        %884 = vmatprep.mubr.bf16.mxu0 0
        %885 = vmatmul.mubr.bf16.gmra.mxu0 %v667
        %v886 = vpop.f32.mrf.mxu0
        %v887 = vadd.f32 %v690, %v886
        %v888 = vpop.f32.mrf.mxu0
        %v889 = vpop.f32.mrf.mxu0
        %v890 = vadd.f32 %v690, %v889
        %v891 = vpop.f32.mrf.mxu0
        %892 = vmatprep.mubr.bf16.mxu0 0
        %893 = vmatmul.mubr.bf16.gmra.mxu0 %v668
        %v894 = vpop.f32.mrf.mxu0
        %v895 = vadd.f32 %v690, %v894
        %v896 = vpop.f32.mrf.mxu0
        %v897 = vpop.f32.mrf.mxu0
        %v898 = vadd.f32 %v690, %v897
        %v899 = vpop.f32.mrf.mxu0
        %900 = vdwg.mxu0
        %v901 = vmax.f32 %v775, 0.0
        %v902 = vmax.f32 %v778, 0.0
        %v903 = vmax.f32 %v783, 0.0
        %v904 = vmax.f32 %v786, 0.0
        %v905 = vmax.f32 %v791, 0.0
        %v906 = vmax.f32 %v794, 0.0
        %v907 = vmax.f32 %v799, 0.0
        %v908 = vmax.f32 %v802, 0.0
        %v909 = vmax.f32 %v807, 0.0
        %v910 = vmax.f32 %v810, 0.0
        %v911 = vmax.f32 %v815, 0.0
        %v912 = vmax.f32 %v818, 0.0
        %v913 = vmax.f32 %v823, 0.0
        %v914 = vmax.f32 %v826, 0.0
        %v915 = vmax.f32 %v831, 0.0
        %v916 = vmax.f32 %v834, 0.0
        %v917 = vmax.f32 %v839, 0.0
        %v918 = vmax.f32 %v842, 0.0
        %v919 = vmax.f32 %v847, 0.0
        %v920 = vmax.f32 %v850, 0.0
        %v921 = vmax.f32 %v855, 0.0
        %v922 = vmax.f32 %v858, 0.0
        %v923 = vmax.f32 %v863, 0.0
        %v924 = vmax.f32 %v866, 0.0
        %v925 = vmax.f32 %v871, 0.0
        %v926 = vmax.f32 %v874, 0.0
        %v927 = vmax.f32 %v879, 0.0
        %v928 = vmax.f32 %v882, 0.0
        %v929 = vmax.f32 %v887, 0.0
        %v930 = vmax.f32 %v890, 0.0
        %v931 = vmax.f32 %v895, 0.0
        %v932 = vmax.f32 %v898, 0.0
        %v933 = vld [vmem:[%s5] sm:$0xf]
        %v934 = vpack.c.bf16 %v902, %v901
        %v935 = vpack.c.bf16 %v904, %v903
        %v936 = vpack.c.bf16 %v906, %v905
        %v937 = vpack.c.bf16 %v908, %v907
        %v938 = vpack.c.bf16 %v910, %v909
        %v939 = vpack.c.bf16 %v912, %v911
        %v940 = vpack.c.bf16 %v914, %v913
        %v941 = vpack.c.bf16 %v916, %v915
        %v942 = vpack.c.bf16 %v918, %v917
        %v943 = vpack.c.bf16 %v920, %v919
        %v944 = vpack.c.bf16 %v922, %v921
        %v945 = vpack.c.bf16 %v924, %v923
        %v946 = vpack.c.bf16 %v926, %v925
        %v947 = vpack.c.bf16 %v928, %v927
        %v948 = vpack.c.bf16 %v930, %v929
        %v949 = vpack.c.bf16 %v932, %v931
        %950 = vmatprep.subr.bf16.mxu0 0
        %951 = vmatpush1.bf16.xpose.msra.mxu0 %v941
        %952 = vmatprep.subr.bf16.mxu0 0
        %953 = vmatpush1.bf16.xpose.msra.mxu0 %v940
        %954 = vmatprep.subr.bf16.mxu0 0
        %955 = vmatpush1.bf16.xpose.msra.mxu0 %v939
        %956 = vmatprep.subr.bf16.mxu0 0
        %957 = vmatpush1.bf16.xpose.msra.mxu0 %v938
        %958 = vmatprep.subr.bf16.mxu0 0
        %959 = vmatpush1.bf16.xpose.msra.mxu0 %v937
        %960 = vmatprep.subr.bf16.mxu0 0
        %961 = vmatpush1.bf16.xpose.msra.mxu0 %v936
        %962 = vmatprep.subr.bf16.mxu0 0
        %963 = vmatpush1.bf16.xpose.msra.mxu0 %v935
        %964 = vmatprep.subr.bf16.mxu0 0
        %965 = vmatpush1.bf16.xpose.msra.mxu0 %v934
        %966 = vmatprep.subr.bf16.mxu0 0
        %967 = vmatpush2.bf16.xpose.msra.mxu0 %v949
        %968 = vmatprep.subr.bf16.mxu0 0
        %969 = vmatpush2.bf16.xpose.msra.mxu0 %v948
        %970 = vmatprep.subr.bf16.mxu0 0
        %971 = vmatpush2.bf16.xpose.msra.mxu0 %v947
        %972 = vmatprep.subr.bf16.mxu0 0
        %973 = vmatpush2.bf16.xpose.msra.mxu0 %v946
        %974 = vmatprep.subr.bf16.mxu0 0
        %975 = vmatpush2.bf16.xpose.msra.mxu0 %v945
        %976 = vmatprep.subr.bf16.mxu0 0
        %977 = vmatpush2.bf16.xpose.msra.mxu0 %v944
        %978 = vmatprep.subr.bf16.mxu0 0
        %979 = vmatpush2.bf16.xpose.msra.mxu0 %v943
        %980 = vmatprep.subr.bf16.mxu0 0
        %981 = vmatpush2.bf16.xpose.msra.mxu0 %v942
        %982 = vmatprep.mubr.bf16.mxu0 0
        %983 = vmatmul.mubr.bf16.gmra.mxu0 %v933
        %v984 = vpop.f32.mrf.mxu0
        %v985 = vadd.f32 0.0, %v984
        %v986 = vpop.f32.mrf.mxu0
        %v987 = vadd.f32 0.0, %v986
        %v988 = vpop.f32.mrf.mxu0
        %v989 = vpop.f32.mrf.mxu0
        %990 = vdwg.mxu0
        %v991 = vld [vmem:[#allocation2] sm:$0x1]
        %993 = vset.pattern.permute.xlu0 0
        %994 = vperm.xlu0 %993, %v991
        %v995 = vpop.permute.xlu0 %994
        %v997 = vlaneseq
        %v998 = vshrl.u32 %v997, 7
        %v999 = vsub.s32 0, %v998
        %v1000 = vrot.slane %v995, %v999
        %v1001 = vadd.f32 %v985, %v1000
        %v1002 = vadd.f32 %v987, %v1000
        %v1005 = vcombine.low %v1001, %v1002
        %v1007 = vunpack.c.l.s4 1966171168
        %v1008 = vunpack.c.0.s8 %v1007
        %v1009 = vlaneseq
        %v1010 = vshrl.u32 %v1009, 7
        %v1011 = vsub.s32 %v1008, %v1010
        %v1012 = vrot.slane %v1005, %v1011
        %v1014 = vunpack.c.l.s4 1966171168
        %v1015 = vunpack.c.0.s8 %v1014
        %v1016 = vlaneseq
        %v1017 = vshrl.u32 %v1016, 7
        %v1018 = vsub.s32 %v1015, %v1017
        %v1019 = vrot.slane %v1012, %v1018
        %v1021 = vlaneseq
        %vm1022 = vcmp.ge.s32.totalorder %v1021, 0
        %vm1023 = vcmp.lt.s32.totalorder %v1021, 256
        %vm1024 = vmand %vm1022, %vm1023
        %1025 = vst.msk [vmem:[%s338] sm:$0x3] %vm1024, %v1019
        %s1026 = smul.u32 2, %s24
        %p1027 = scmp.lt.s32.totalorder %s1026, 3
        %s1028 = scalar_select %p1027, %s1026, 3
        %s1029 = scalar_lea.vmem %s7, %s1028
        // Predicated region
        $region61: #{classification_network_forward.1} parent=47 // pred_check
          %p1030 = pneg %p194
        $region62: #{classification_network_forward.1} parent=47 // pred_check_branch
          %1032 = sbr.rel (%p1030) target = $region64
        $region63: #{classification_network_forward.1} parent=47 // pred_region
          %s1033 = smul.u32 2, %s24
        $region64: #{classification_network_forward.1} parent=47 // pred_fallthru
          _
      $region48: #{classification_network_forward.1} parent=5 // pred_fallthru
        _
      %p1034 = scmp.le.s32.totalorder 2, %s19
      // Predicated region
      $region65: #{classification_network_forward.1} parent=5 // pred_check
        %p1035 = pneg %p1034
      $region66: #{classification_network_forward.1} parent=5 // pred_check_branch
        %1037 = sbr.rel (%p1035) target = $region68
      $region67: #{classification_network_forward.1} parent=5 // pred_region
        %s1038 = ssub.s32 %s19, 2
        // Predicated region
        $region69: #{classification_network_forward.1} parent=67 // pred_check
          %p1039 = pneg %p200
        $region70: #{classification_network_forward.1} parent=67 // pred_check_branch
          %1041 = sbr.rel (%p1039) target = $region72
        $region71: #{classification_network_forward.1} parent=67 // pred_region
          %s1042 = smul.u32 2, %s25
          %p1043 = scmp.lt.s32.totalorder %s1042, 3
          %s1044 = scalar_select %p1043, %s1042, 3
          %s1045 = scalar_lea.vmem %s7, %s1044
        $region72: #{classification_network_forward.1} parent=67 // pred_fallthru
          _
      $region68: #{classification_network_forward.1} parent=5 // pred_fallthru
        _
    $region6: #{classification_network_forward.1} parent=1 // loop_footer
      %s23 = sadd.s32 1, %s19
    $region7: #{classification_network_forward.1} parent=1 // loop_footer_branch
      %18 = sbr.rel target = $region3
    $region8: #{classification_network_forward.1} parent=1 // loop_exit
      _
    %1046 = vsyncpa [#allocation4], 1
    %s1047 = scalar_lea.sflag [#allocation4], 1
    %1048 = vsyncpa %s1047, 1
    %1049 = vsyncpa [#allocation6], 1

</llo_original>
